<compile_context>
chip_gen: v7x
topology: tpu7x:2x2x1
jax: 0.10.0
libtpu: 0.0.40
codegen_flags: <defaults>
</compile_context>

<pallas_src>
import functools

import jax
import jax.numpy as jnp
from jax.experimental import pallas as pl
from jax.experimental.pallas import tpu as pltpu


# ---------------------------------------------------------------------------
# Shared helpers
# ---------------------------------------------------------------------------

def _keep_indices(key, B, N, num_keep):
    # TODO(synk): torch.randn(b, n).topk(k) index selection (random scores + top-k)
    # has no clean in-kernel Pallas equivalent; it stays in JAX.
    scores = jax.random.normal(key, (B, N), dtype=jnp.float32)
    _, keep_idx = jax.lax.top_k(scores, num_keep)          # descending score order
    return keep_idx.astype(jnp.int32)                      # (B, num_keep)


def _vmem_limit(est_bytes):
    # Explicit scoped-VMEM budget: comfortably above our tile estimate, and below
    # v7x's 64 MiB physical VMEM (v5e/v6e have 128 MiB, so this is always safe).
    return int(min(max(est_bytes + (8 << 20), 24 << 20), 60 << 20))


# ---------------------------------------------------------------------------
# Path 1: one-hot selection matmul on the MXU (D tiled, onehot reused via scratch)
# ---------------------------------------------------------------------------

def _plan_onehot_tiles(B, N, D, K, itemsize, budget=28 << 20):
    """Pick (Bb, Td) so the double-buffered working set fits the VMEM budget."""
    # Lane tile of D: multiple of 128 (or the full, untiled D).
    Td = min(D, 512) if D % 128 == 0 else D

    def est(bb, td):
        return (2 * bb * N * td * itemsize        # double-buffered x block
                + 2 * bb * K * td * itemsize      # double-buffered out block
                + 2 * bb * K * 4                  # double-buffered idx block
                + bb * K * N * itemsize           # one-hot scratch (single copy)
                + bb * K * td * 4)                # f32 matmul result temp

    Bb = min(8, B)
    if B > 1:                                     # >= 2 batch steps -> both v7x TCs busy
        Bb = min(Bb, pl.cdiv(B, 2))
    while Bb > 1 and est(Bb, Td) > budget:
        Bb = max(1, Bb // 2)
    while Td > 128 and Td % 256 == 0 and est(Bb, Td) > budget:
        Td //= 2
    return Bb, Td, est(Bb, Td)


def _onehot_kernel(idx_ref, x_ref, o_ref, onehot_ref, *, precision):
    # idx_ref:    VMEM (Bb, 1, K) int32   -- keep indices for this batch block
    # x_ref:      VMEM (Bb, N, Td)        -- patch slab (D tile)
    # o_ref:      VMEM (Bb, K, Td)        -- gathered output (D tile)
    # onehot_ref: VMEM scratch (Bb, K, N) -- built once per batch block, reused
    #                                        across all D tiles (inner grid axis).
    @pl.when(pl.program_id(1) == 0)
    def _():
        Bb, K, N = onehot_ref.shape
        idx = idx_ref[:, 0, :]                                        # (Bb, K)
        iota_n = jax.lax.broadcasted_iota(jnp.int32, (Bb, K, N), 2)
        onehot_ref[...] = (iota_n == idx[:, :, None]).astype(onehot_ref.dtype)

    gathered = jnp.einsum(                                            # rides the MXU
        "bkn,bnd->bkd", onehot_ref[...], x_ref[...],
        preferred_element_type=jnp.float32, precision=precision)      # (Bb, K, Td) f32
    o_ref[...] = gathered.astype(o_ref.dtype)


def _gather_onehot(x, keep_idx, K, block_b=None, block_d=None):
    B, N, D = x.shape
    assert jnp.issubdtype(x.dtype, jnp.floating), (
        "one-hot MXU gather needs a float dtype; use method='dma' otherwise")
    itemsize = jnp.dtype(x.dtype).itemsize

    Bb, Td, est = _plan_onehot_tiles(B, N, D, K, itemsize)
    if block_b is not None:
        Bb = block_b
    if block_d is not None:
        Td = block_d
    assert Td == D or Td % 128 == 0, "D tile must be a multiple of 128 (or the full D)"

    # f32 "gather" must not be degraded by reduced-precision MXU passes.
    precision = jax.lax.Precision.HIGHEST if x.dtype == jnp.float32 else None

    grid = (pl.cdiv(B, Bb), pl.cdiv(D, Td))   # ragged last blocks are masked by Pallas
    idx3 = keep_idx[:, None, :]               # (B, 1, K)

    kernel = functools.partial(_onehot_kernel, precision=precision)
    return pl.pallas_call(
        kernel,
        out_shape=jax.ShapeDtypeStruct((B, K, D), x.dtype),
        grid=grid,
        in_specs=[
            pl.BlockSpec((Bb, 1, K), lambda b, d: (b, 0, 0)),    # keep indices
            pl.BlockSpec((Bb, N, Td), lambda b, d: (b, 0, d)),   # patches (D tile)
        ],
        out_specs=pl.BlockSpec((Bb, K, Td), lambda b, d: (b, 0, d)),
        scratch_shapes=[pltpu.VMEM((Bb, K, N), x.dtype)],        # reused one-hot
        compiler_params=pltpu.CompilerParams(
            dimension_semantics=("parallel", "arbitrary"),
            vmem_limit_bytes=_vmem_limit(est)),
        cost_estimate=pl.CostEstimate(
            flops=2 * B * K * N * D,
            bytes_accessed=(B * N * D + B * K * D) * itemsize + B * K * 4,
            transcendentals=0),
    )(idx3, x)


# ---------------------------------------------------------------------------
# Path 2: HBM row gather via manual DMA (reads only the kept rows)
# ---------------------------------------------------------------------------

def _dma_kernel(idx_ref, x_hbm, o_ref, sem, *, in_flight):
    # idx_ref: SMEM (B*K,) int32 (scalar prefetch)
    # x_hbm:   (B, N, D) ref left in HBM (memory_space=pl.ANY)
    # o_ref:   VMEM (1, K, D) output block for batch row b
    # sem:     DMA semaphores, shape (in_flight,)
    b = pl.program_id(0)
    K = o_ref.shape[1]
    base = b * K

    def row_copy(k, slot):
        row = idx_ref[base + k]
        return pltpu.make_async_copy(
            x_hbm.at[b, pl.ds(row, 1), :],       # (1, D) row in HBM
            o_ref.at[0, pl.ds(k, 1), :],         # (1, D) row in the output block
            sem.at[slot])

    for w in range(in_flight):                   # prime the window (static unroll)
        row_copy(w, w).start()

    def body(k, carry):
        row_copy(k, k % in_flight).wait()

        @pl.when(k + in_flight < K)
        def _():
            row_copy(k + in_flight, k % in_flight).start()
        return carry

    jax.lax.fori_loop(0, K, body, 0)


def _gather_dma(x, keep_idx, K):
    B, N, D = x.shape
    itemsize = jnp.dtype(x.dtype).itemsize
    in_flight = min(8, K)
    idx_flat = keep_idx.reshape(-1)              # (B*K,) int32, prefetched to SMEM

    out_bytes = 2 * K * D * itemsize             # double-buffered output block
    kernel = functools.partial(_dma_kernel, in_flight=in_flight)
    return pl.pallas_call(
        kernel,
        out_shape=jax.ShapeDtypeStruct((B, K, D), x.dtype),
        grid_spec=pltpu.PrefetchScalarGridSpec(
            num_scalar_prefetch=1,
            grid=(B,),
            in_specs=[pl.BlockSpec(memory_space=pl.ANY)],          # x stays in HBM
            out_specs=pl.BlockSpec((1, K, D), lambda b, idx: (b, 0, 0)),
            scratch_shapes=[pltpu.SemaphoreType.DMA((in_flight,))]),
        compiler_params=pltpu.CompilerParams(
            dimension_semantics=("parallel",),
            vmem_limit_bytes=_vmem_limit(out_bytes)),
        cost_estimate=pl.CostEstimate(
            flops=0,
            bytes_accessed=2 * B * K * D * itemsize + B * K * 4,
            transcendentals=0),
    )(idx_flat, x)


# ---------------------------------------------------------------------------
# Public wrapper (PatchDropout.forward equivalent)
# ---------------------------------------------------------------------------

def patch_dropout(x, key, prob, training=True, method="auto",
                  block_b=None, block_d=None):
    """JAX/Pallas equivalent of PatchDropout.forward."""
    assert 0.0 <= prob < 1.0
    if (not training) or prob == 0.0:
        return x

    B, N, D = x.shape
    K = max(1, int(N * (1.0 - prob)))
    keep_idx = _keep_indices(key, B, N, K)       # (B, K)

    if method == "auto":
        row_bytes = D * jnp.dtype(x.dtype).itemsize
        if not jnp.issubdtype(x.dtype, jnp.floating):
            method = "dma"       # MXU one-hot needs float; DMA copies are dtype-agnostic
        elif prob >= 0.5 and row_bytes >= 2048:
            method = "dma"       # read only K/N of the HBM bytes
        else:
            method = "onehot"

    if method == "dma":
        return _gather_dma(x, keep_idx, K)
    return _gather_onehot(x, keep_idx, K, block_b=block_b, block_d=block_d)


def _reference(x, key, prob):
    B, N, _ = x.shape
    K = max(1, int(N * (1.0 - prob)))
    keep_idx = _keep_indices(key, B, N, K)
    return jnp.take_along_axis(x, keep_idx[..., None], axis=1)


if __name__ == "__main__":
    root = jax.random.PRNGKey(0)
    kx1, kd1, kx2, kd2, kx3, kd3, kx4, kd4 = jax.random.split(root, 8)

    # 1) one-hot MXU gather, bf16 (exact selection), single D tile, 2 batch blocks.
    B, N, D, prob = 2, 8, 32, 0.5                       # K = 4
    x = jax.random.normal(kx1, (B, N, D), dtype=jnp.float32).astype(jnp.bfloat16)
    out = jax.block_until_ready(patch_dropout(x, kd1, prob, method="onehot"))
    ref = _reference(x, kd1, prob)
    assert out.shape == ref.shape == (B, 4, D) and out.dtype == x.dtype
    assert jnp.array_equal(out, ref), "onehot bf16 mismatch"

    # 2) one-hot gather, bf16, ragged batch grid (B=5, Bb=3) + two D tiles (Td=128).
    B2, N2, D2, prob2 = 5, 16, 256, 0.25                # K = 12
    x2 = jax.random.normal(kx2, (B2, N2, D2), dtype=jnp.float32).astype(jnp.bfloat16)
    out2 = jax.block_until_ready(
        patch_dropout(x2, kd2, prob2, method="onehot", block_d=128))
    ref2 = _reference(x2, kd2, prob2)
    assert out2.shape == (B2, 12, D2)
    assert jnp.array_equal(out2, ref2), "onehot bf16 ragged/tiled mismatch"

    # 3) one-hot gather, f32 (Precision.HIGHEST keeps the gather near-exact).
    B3, N3, D3, prob3 = 4, 16, 128, 0.25                # K = 12
    x3 = jax.random.normal(kx3, (B3, N3, D3), dtype=jnp.float32)
    out3 = jax.block_until_ready(patch_dropout(x3, kd3, prob3, method="onehot"))
    ref3 = _reference(x3, kd3, prob3)
    assert out3.shape == (B3, 12, D3)
    assert jnp.allclose(out3, ref3, rtol=1e-2, atol=1e-2), "onehot f32 mismatch"

    # 4) HBM row-gather (manual DMA) path, f32, prob >= 0.5 -> exact copies.
    B4, N4, D4, prob4 = 4, 32, 128, 0.5                 # K = 16
    x4 = jax.random.normal(kx4, (B4, N4, D4), dtype=jnp.float32)
    out4 = jax.block_until_ready(patch_dropout(x4, kd4, prob4, method="dma"))
    ref4 = _reference(x4, kd4, prob4)
    assert out4.shape == (B4, 16, D4)
    assert jnp.array_equal(out4, ref4), "dma gather mismatch"

    # 5) eval mode / prob == 0 is the identity.
    assert jnp.array_equal(patch_dropout(x3, kd3, prob3, training=False), x3)
    assert jnp.array_equal(patch_dropout(x3, kd3, 0.0), x3)

    print("KERNEL_OK")
</pallas_src>

<mosaic_0001>
module attributes {stable_mosaic.version = 11 : i64} {
  func.func @_onehot_kernel(%arg0: i32, %arg1: i32, %arg2: memref<1x1x4xi32, #tpu.memory_space<vmem>>, %arg3: memref<1x8x32xbf16, #tpu.memory_space<vmem>>, %arg4: memref<1x4x32xbf16, #tpu.memory_space<vmem>>, %arg5: memref<1x4x8xbf16, #tpu.memory_space<vmem>>) attributes {dimension_semantics = [#tpu.dimension_semantics<parallel>, #tpu.dimension_semantics<arbitrary>], iteration_bounds = array<i64: 2, 1>, scalar_prefetch = 0 : i64, scratch_operands = 1 : i64, tpu.core_type = #tpu.core_type<tc>, window_params = [{transform_indices = @transform_0, window_bounds = array<i64: 1, 1, 4>}, {transform_indices = @transform_1, window_bounds = array<i64: 1, 8, 32>}, {transform_indices = @transform_2, window_bounds = array<i64: 1, 4, 32>}]} {
    %c0_i32 = arith.constant 0 : i32
    %0 = arith.cmpi eq, %arg1, %c0_i32 : i32
    %1 = arith.extui %0 : i1 to i32
    %c0_i32_0 = arith.constant 0 : i32
    %2 = arith.cmpi ne, %1, %c0_i32_0 : i32
    scf.if %2 {
      %c0_9 = arith.constant 0 : index
      %c0_10 = arith.constant 0 : index
      %c0_11 = arith.constant 0 : index
      %8 = vector.load %arg2[%c0_9, %c0_10, %c0_11] : memref<1x1x4xi32, #tpu.memory_space<vmem>>, vector<1x1x4xi32>
      %9 = vector.shape_cast %8 : vector<1x1x4xi32> to vector<1x4xi32>
      %10 = tpu.iota {dimensions = array<i32: 2>} : vector<1x4x8xi32>
      %11 = vector.shape_cast %9 : vector<1x4xi32> to vector<1x4x1xi32>
      %12 = vector.broadcast %11 : vector<1x4x1xi32> to vector<1x4x8xi32>
      %13 = arith.cmpi eq, %10, %12 : vector<1x4x8xi32>
      %14 = arith.extui %13 : vector<1x4x8xi1> to vector<1x4x8xi32>
      %15 = arith.sitofp %14 : vector<1x4x8xi32> to vector<1x4x8xf32>
      %16 = arith.truncf %15 : vector<1x4x8xf32> to vector<1x4x8xbf16>
      %c0_12 = arith.constant 0 : index
      %c0_13 = arith.constant 0 : index
      %c0_14 = arith.constant 0 : index
      %17 = vector.load %arg5[%c0_12, %c0_13, %c0_14] : memref<1x4x8xbf16, #tpu.memory_space<vmem>>, vector<1x4x8xbf16>
      tpu.vector_store %arg5[%c0_12, %c0_13, %c0_14], %16 {strides = array<i32>} : memref<1x4x8xbf16, #tpu.memory_space<vmem>>, vector<1x4x8xbf16>,
    } else {
    }
    %c0 = arith.constant 0 : index
    %c0_1 = arith.constant 0 : index
    %c0_2 = arith.constant 0 : index
    %3 = vector.load %arg5[%c0, %c0_1, %c0_2] : memref<1x4x8xbf16, #tpu.memory_space<vmem>>, vector<1x4x8xbf16>
    %c0_3 = arith.constant 0 : index
    %c0_4 = arith.constant 0 : index
    %c0_5 = arith.constant 0 : index
    %4 = vector.load %arg3[%c0_3, %c0_4, %c0_5] : memref<1x8x32xbf16, #tpu.memory_space<vmem>>, vector<1x8x32xbf16>
    "tpu.trace_start"() <{level = 10 : i32, message = "bkn,bnd->bkd"}> : () -> ()
    %cst = arith.constant dense<0.000000e+00> : vector<1x4x32xf32>
    %5 = tpu.matmul %3, %4, %cst {dimension_numbers = #tpu.dot_dimension_numbers<[2], [1], [1], [2], [0, 0, 0, 1, 1, 2], [0], [0]>} : vector<1x4x8xbf16>, vector<1x8x32xbf16>, vector<1x4x32xf32> -> vector<1x4x32xf32>
    "tpu.trace_stop"() : () -> ()
    %6 = arith.truncf %5 : vector<1x4x32xf32> to vector<1x4x32xbf16>
    %c0_6 = arith.constant 0 : index
    %c0_7 = arith.constant 0 : index
    %c0_8 = arith.constant 0 : index
    %7 = vector.load %arg4[%c0_6, %c0_7, %c0_8] : memref<1x4x32xbf16, #tpu.memory_space<vmem>>, vector<1x4x32xbf16>
    tpu.vector_store %arg4[%c0_6, %c0_7, %c0_8], %6 {strides = array<i32>} : memref<1x4x32xbf16, #tpu.memory_space<vmem>>, vector<1x4x32xbf16>,
    return
  }
  func.func @transform_0(%arg0: i32, %arg1: i32) -> (i32, i32, i32) {
    %c0_i32 = arith.constant 0 : i32
    %c0_i32_0 = arith.constant 0 : i32
    %c0_i32_1 = arith.constant 0 : i32
    return %arg0, %c0_i32, %c0_i32_0 : i32, i32, i32
  }
  func.func @transform_1(%arg0: i32, %arg1: i32) -> (i32, i32, i32) {
    %c0_i32 = arith.constant 0 : i32
    %c0_i32_0 = arith.constant 0 : i32
    return %arg0, %c0_i32, %arg1 : i32, i32, i32
  }
  func.func @transform_2(%arg0: i32, %arg1: i32) -> (i32, i32, i32) {
    %c0_i32 = arith.constant 0 : i32
    %c0_i32_0 = arith.constant 0 : i32
    return %arg0, %c0_i32, %arg1 : i32, i32, i32
  }
}

</mosaic_0001>

<llo_original>
// kernel: tpu_custom_call.1
$region0: #{tpu_custom_call.1}
  #allocation0 [shape = 'u32[]', space=smem, size = 0x4, offset = 0x4, fixed_abs, tag = 'smem constant byte address 0x4 - core index']
  #allocation1 [shape = 'u32[144,128]{1,0:T(1,128)}', space=vmem, size = 0x12000, scoped, tag = 'internal scratch']
  #allocation2 [shape = 'bf16[1,4,8]{2,1,0:T(4,128)(2,1)}', space=vmem, size = 0x400, scoped, tag = 'scratch operand']
  %s0 = inlined_call_operand.hbm [shape: s32[2,1,4], index: 0, kind: input, shape index: {}]
  %s1 = inlined_call_operand.hbm [shape: bf16[2,8,32], index: 1, kind: input, shape index: {}]
  %s2 = inlined_call_operand.hbm [shape: bf16[2,4,32], index: 2, kind: output, shape index: {}]
  %s3 = sld [smem:[#allocation0]]
  $region53: #{tpu_custom_call.1} parent=0
    _
  %s5 = ssub.s32 1, %s3
  %s6 = scalar_select 0, %s5, %s3
  $region1: #{tpu_custom_call.1} parent=0
    #allocation3 [shape = 'u8[1024]{0}', space=vmem, size = 0x400, scoped, tag = 'input window, operand 0']
    #allocation4 [shape = 's32[2]{0}', space=sflag, size = 0x8, scoped, tag = 'scoped memory for tpu_custom_call.1']
    #allocation5 [shape = 's32[2]{0}', space=sflag, size = 0x8, scoped, tag = 'scoped memory for tpu_custom_call.1']
    #allocation6 [shape = 'u8[4096]{0}', space=vmem, size = 0x1000, scoped, tag = 'input window, operand 1']
    #allocation7 [shape = 's32[2]{0}', space=sflag, size = 0x8, scoped, tag = 'scoped memory for tpu_custom_call.1']
    #allocation8 [shape = 'u8[2048]{0}', space=vmem, size = 0x800, scoped, tag = 'output window, operand 0']
    %7 = vsyncpa [#allocation4], 0
    %s8 = scalar_lea.sflag [#allocation4], 1
    %9 = vsyncpa %s8, 0
    %10 = vsyncpa [#allocation7], 0
    %s11 = scalar_lea.sflag [#allocation7], 1
    %12 = vsyncpa %s11, 0
    %13 = vsyncpa [#allocation5], 0
    %s14 = scalar_lea.sflag [#allocation5], 1
    %15 = vsyncpa %s14, 0
    loop: start=0, step=1, limit=4
    $region2: #{tpu_custom_call.1} parent=1 // loop_pre_header
      _
    $region3: #{tpu_custom_call.1} parent=1 // loop_header
      %s17 = sphi 0, %s21
      %p18 = scmp.ge.s32.totalorder %s17, 4
      %s24 = sphi 0, %s36
      %s25 = sphi 0, %s32
      %s26 = sphi 0, %s24
      %s27 = sphi 0, %s25
      %s28 = sphi 0, %s26
      %s29 = sphi 0, %s27
      %s39 = sphi 0, %s41
      %s42 = sphi 0, %s39
      %s43 = sphi 0, %s42
      %s59 = sphi 0, %s43
      %s67 = sphi 0, %s69
      %s70 = sphi 0, %s67
      %s71 = sphi 0, %s70
      %s87 = sphi 0, %s71
      %s95 = sphi 0, %s97
      %s98 = sphi 0, %s95
      %s99 = sphi 0, %s98
      %s115 = sphi 0, %s99
    $region4: #{tpu_custom_call.1} parent=1 // loop_header_branch
      %20 = sbr.rel (%p18) target = $region8
    $region5: #{tpu_custom_call.1} parent=1 // loop_body
      %s22 = ssub.s32 %s17, 1
      %s23 = ssub.s32 %s17, 2
      %s30 = sadd.s32 1, %s25
      %p31 = scmp.ge.s32.totalorder %s30, 1
      %s32 = scalar_select %p31, 0, %s30
      %s33 = sadd.s32 1, %s24
      %s34 = scalar_select %p31, %s33, %s24
      %p35 = scmp.ge.s32.totalorder %s34, 2
      %s36 = scalar_select %p35, 0, %s34
      %s37 = ssub.s32 %s24, %s36
      %p38 = scmp.eq.s32.totalorder %s37, 0
      %s40 = sadd.s32 %s39, 1
      %s41 = scalar_select %p38, %s39, %s40
      %p44 = pneg %p38
      %p45 = scmp.eq.s32.totalorder %s17, 1
      %p46 = por %p44, %p45
      %p47 = scmp.ne.s32.totalorder %s39, %s42
      %p48 = scmp.eq.s32.totalorder %s17, 0
      %p49 = por %p47, %p48
      %p50 = scmp.ne.s32.totalorder %s39, %s42
      %p51 = scmp.eq.s32.totalorder %s22, 1
      %p52 = por %p50, %p51
      %p53 = scmp.ne.s32.totalorder %s42, %s43
      %p54 = scmp.eq.s32.totalorder %s22, 0
      %p55 = por %p53, %p54
      %p56 = scmp.ne.s32.totalorder %s42, %s43
      %p57 = scmp.eq.s32.totalorder %s23, 1
      %p58 = por %p56, %p57
      %p60 = scmp.ne.s32.totalorder %s43, %s59
      %p61 = scmp.eq.s32.totalorder %s23, 0
      %p62 = por %p60, %p61
      %s63 = ssub.s32 %s24, %s36
      %s64 = ssub.s32 %s25, %s32
      %s65 = sor.u32 %s63, %s64
      %p66 = scmp.eq.s32.totalorder %s65, 0
      %s68 = sadd.s32 %s67, 1
      %s69 = scalar_select %p66, %s67, %s68
      %p72 = pneg %p66
      %p73 = scmp.eq.s32.totalorder %s17, 1
      %p74 = por %p72, %p73
      %p75 = scmp.ne.s32.totalorder %s67, %s70
      %p76 = scmp.eq.s32.totalorder %s17, 0
      %p77 = por %p75, %p76
      %p78 = scmp.ne.s32.totalorder %s67, %s70
      %p79 = scmp.eq.s32.totalorder %s22, 1
      %p80 = por %p78, %p79
      %p81 = scmp.ne.s32.totalorder %s70, %s71
      %p82 = scmp.eq.s32.totalorder %s22, 0
      %p83 = por %p81, %p82
      %p84 = scmp.ne.s32.totalorder %s70, %s71
      %p85 = scmp.eq.s32.totalorder %s23, 1
      %p86 = por %p84, %p85
      %p88 = scmp.ne.s32.totalorder %s71, %s87
      %p89 = scmp.eq.s32.totalorder %s23, 0
      %p90 = por %p88, %p89
      %s91 = ssub.s32 %s24, %s36
      %s92 = ssub.s32 %s25, %s32
      %s93 = sor.u32 %s91, %s92
      %p94 = scmp.eq.s32.totalorder %s93, 0
      %s96 = sadd.s32 %s95, 1
      %s97 = scalar_select %p94, %s95, %s96
      %p100 = pneg %p94
      %p101 = scmp.eq.s32.totalorder %s17, 1
      %p102 = por %p100, %p101
      %p103 = scmp.ne.s32.totalorder %s95, %s98
      %p104 = scmp.eq.s32.totalorder %s17, 0
      %p105 = por %p103, %p104
      %p106 = scmp.ne.s32.totalorder %s95, %s98
      %p107 = scmp.eq.s32.totalorder %s22, 1
      %p108 = por %p106, %p107
      %p109 = scmp.ne.s32.totalorder %s98, %s99
      %p110 = scmp.eq.s32.totalorder %s22, 0
      %p111 = por %p109, %p110
      %p112 = scmp.ne.s32.totalorder %s98, %s99
      %p113 = scmp.eq.s32.totalorder %s23, 1
      %p114 = por %p112, %p113
      %p116 = scmp.ne.s32.totalorder %s99, %s115
      %p117 = scmp.eq.s32.totalorder %s23, 0
      %p118 = por %p116, %p117
      %p119 = scmp.le.s32.totalorder 1, %s17
      %p120 = scmp.lt.s32.totalorder %s17, 3
      %p121 = pnand %p119, %p120
      %p122 = pneg %p121
      // Predicated region
      $region9: #{tpu_custom_call.1} parent=5 // pred_check
        _
      $region10: #{tpu_custom_call.1} parent=5 // pred_check_branch
        %124 = sbr.rel (%p121) target = $region12
      $region11: #{tpu_custom_call.1} parent=5 // pred_region
        %s125 = ssub.s32 %s17, 1
      $region12: #{tpu_custom_call.1} parent=5 // pred_fallthru
        _
      %p126 = scmp.lt.s32.totalorder %s17, 2
      // Predicated region
      $region13: #{tpu_custom_call.1} parent=5 // pred_check
        %p127 = pneg %p126
      $region14: #{tpu_custom_call.1} parent=5 // pred_check_branch
        %129 = sbr.rel (%p127) target = $region16
      $region15: #{tpu_custom_call.1} parent=5 // pred_region
        // Predicated region
        $region17: #{tpu_custom_call.1} parent=15 // pred_check
          %p130 = pneg %p49
        $region18: #{tpu_custom_call.1} parent=15 // pred_check_branch
          %132 = sbr.rel (%p130) target = $region20
        $region19: #{tpu_custom_call.1} parent=15 // pred_region
          %s133 = sand.u32 %s39, 1
          %s134 = scalar_lea.sflag [#allocation4], %s133
          %s135 = sand.u32 %s39, 1
          %s136 = scalar_lea.vmem [#allocation3], %s135
          %s138 = ssub.s32 16, 16
          %139 = vsyncadd %s134, %s138
          %s140 = smul.addr %s24, 16
          %s141 = scalar_lea.hbm %s0, %s140
          %s143 = sshll.u32 %s136, 4
          %s144 = int_to_ptr.vmem [resolvable:$true] %s143
          %146 = dma.hbm_to_vmem [thread:$0]  %s141, 16, %s144, %s134
        $region20: #{tpu_custom_call.1} parent=15 // pred_fallthru
          _
        // Predicated region
        $region21: #{tpu_custom_call.1} parent=15 // pred_check
          %p147 = pneg %p77
        $region22: #{tpu_custom_call.1} parent=15 // pred_check_branch
          %149 = sbr.rel (%p147) target = $region24
        $region23: #{tpu_custom_call.1} parent=15 // pred_region
          %s150 = sand.u32 %s67, 1
          %s151 = scalar_lea.sflag [#allocation7], %s150
          %s152 = sand.u32 %s67, 1
          %s153 = smul.addr %s152, 4
          %s154 = scalar_lea.vmem [#allocation6], %s153
          %s156 = ssub.s32 64, 64
          %157 = vsyncadd %s151, %s156
          %s158 = sadd.s32 %s25, %s24
          %s159 = smul.addr %s158, 64
          %s160 = scalar_lea.hbm %s1, %s159
          %s162 = sshll.u32 %s154, 4
          %s163 = int_to_ptr.vmem [resolvable:$true] %s162
          %165 = dma.hbm_to_vmem [thread:$0]  %s160, 64, %s163, %s151
        $region24: #{tpu_custom_call.1} parent=15 // pred_fallthru
          _
      $region16: #{tpu_custom_call.1} parent=5 // pred_fallthru
        _
      %p166 = scmp.le.s32.totalorder 1, %s17
      %p167 = scmp.lt.s32.totalorder %s17, 3
      %p168 = pnand %p166, %p167
      %p169 = pneg %p168
      // Predicated region
      $region25: #{tpu_custom_call.1} parent=5 // pred_check
        _
      $region26: #{tpu_custom_call.1} parent=5 // pred_check_branch
        %171 = sbr.rel (%p168) target = $region28
      $region27: #{tpu_custom_call.1} parent=5 // pred_region
        %s172 = ssub.s32 %s17, 1
        %s173 = sand.u32 %s42, 1
        %s174 = scalar_lea.sflag [#allocation4], %s173
        %s175 = sand.u32 %s42, 1
        %s176 = scalar_lea.vmem [#allocation3], %s175
        // Predicated region
        $region29: #{tpu_custom_call.1} parent=27 // pred_check
          %p177 = pneg %p55
        $region30: #{tpu_custom_call.1} parent=27 // pred_check_branch
          %179 = sbr.rel (%p177) target = $region32
        $region31: #{tpu_custom_call.1} parent=27 // pred_region
          %180 = dma.done %s174, 16
        $region32: #{tpu_custom_call.1} parent=27 // pred_fallthru
          _
        %s181 = sand.u32 %s70, 1
        %s182 = scalar_lea.sflag [#allocation7], %s181
        %s183 = sand.u32 %s70, 1
        %s184 = smul.addr %s183, 4
        %s185 = scalar_lea.vmem [#allocation6], %s184
        // Predicated region
        $region33: #{tpu_custom_call.1} parent=27 // pred_check
          %p186 = pneg %p83
        $region34: #{tpu_custom_call.1} parent=27 // pred_check_branch
          %188 = sbr.rel (%p186) target = $region36
        $region35: #{tpu_custom_call.1} parent=27 // pred_region
          %189 = dma.done %s182, 64
        $region36: #{tpu_custom_call.1} parent=27 // pred_fallthru
          _
        %s190 = sand.u32 %s42, 1
        %s191 = scalar_lea.sflag [#allocation4], %s190
        %s192 = sand.u32 %s42, 1
        %s193 = scalar_lea.vmem [#allocation3], %s192
        %p194 = pneg %p55
        %p195 = pneg %p52
        %s196 = sand.u32 %s70, 1
        %s197 = scalar_lea.sflag [#allocation7], %s196
        %s198 = sand.u32 %s70, 1
        %s199 = smul.addr %s198, 4
        %s200 = scalar_lea.vmem [#allocation6], %s199
        %p201 = pneg %p83
        %p202 = pneg %p80
        %p203 = pneg %p111
        %p204 = pneg %p108
        %s205 = sand.u32 %s98, 1
        %s206 = scalar_lea.sflag [#allocation5], %s205
        %s207 = sand.u32 %s98, 1
        %s208 = smul.addr %s207, 2
        %s209 = scalar_lea.vmem [#allocation8], %s208
        %p211 = scmp.eq.s32.totalorder %s27, 0
        // Predicated region
        $region37: #{tpu_custom_call.1} parent=27 // pred_check
          %p212 = pneg %p211
        $region38: #{tpu_custom_call.1} parent=27 // pred_check_branch
          %214 = sbr.rel (%p212) target = $region40
        $region39: #{tpu_custom_call.1} parent=27 // pred_region
          %v215 = vld [vmem:[%s176] sm:$0x1]
          %v216 = vlaneseq
          %v217 = vand.u32 %v216, 127
          %v218 = vlaneseq
          %v219 = vshrl.u32 %v218, 7
          %v220 = vsub.s32 0, %v219
          %v221 = vrot.slane %v215, %v220
          %223 = vbcast.lane.b32.xlu0 %v221, 256
          %v224 = vpop.permute.xlu0 %223
          %vm225 = vcmp.eq.s32.totalorder %v217, %v224
          %v226 = vsel %vm225, 1, 0
          %v227 = vcvt.s32.f32 %v226
          %v228 = vpack.c.bf16 %v227, %v227
          %vm229 = vcmask 58368
          %230 = vst.msk [vmem:[#allocation2] sm:$0x3] %vm229, %v228
        $region40: #{tpu_custom_call.1} parent=27 // pred_fallthru
          _
        %v231 = vld [vmem:[#allocation2] sm:$0x3]
        %v232 = vld [vmem:[%s185] sm:$0xf]
        %vm233 = vcmask 64512
        %v235 = vsel %vm233, %v231, 0
        %vm237 = vcmask 1043456
        %v239 = vsel %vm237, %v232, 0
        %241 = vmatprep.subr.bf16.mxu0 0
        %242 = vmatpush1.bf16.msra.mxu0 %v239
        %243 = vmatprep.subr.bf16.mxu0 0
        %244 = vmatpush1.bf16.msra.mxu0 0
        %245 = vmatprep.subr.bf16.mxu0 0
        %246 = vmatpush1.bf16.msra.mxu0 0
        %247 = vmatprep.subr.bf16.mxu0 0
        %248 = vmatpush1.bf16.msra.mxu0 0
        %249 = vmatprep.subr.bf16.mxu0 0
        %250 = vmatpush1.bf16.msra.mxu0 0
        %251 = vmatprep.subr.bf16.mxu0 0
        %252 = vmatpush1.bf16.msra.mxu0 0
        %253 = vmatprep.subr.bf16.mxu0 0
        %254 = vmatpush1.bf16.msra.mxu0 0
        %255 = vmatprep.subr.bf16.mxu0 0
        %256 = vmatpush1.bf16.msra.mxu0 0
        %257 = vmatprep.subr.bf16.mxu0 0
        %258 = vmatpush1.bf16.msra.mxu0 0
        %259 = vmatprep.subr.bf16.mxu0 0
        %260 = vmatpush1.bf16.msra.mxu0 0
        %261 = vmatprep.subr.bf16.mxu0 0
        %262 = vmatpush1.bf16.msra.mxu0 0
        %263 = vmatprep.subr.bf16.mxu0 0
        %264 = vmatpush1.bf16.msra.mxu0 0
        %265 = vmatprep.subr.bf16.mxu0 0
        %266 = vmatpush1.bf16.msra.mxu0 0
        %267 = vmatprep.subr.bf16.mxu0 0
        %268 = vmatpush1.bf16.msra.mxu0 0
        %269 = vmatprep.subr.bf16.mxu0 0
        %270 = vmatpush1.bf16.msra.mxu0 0
        %271 = vmatprep.subr.bf16.mxu0 0
        %272 = vmatpush1.bf16.msra.mxu0 0
        %273 = vmatprep.mubr.bf16.mxu0 0
        %274 = vmatmul.mubr.bf16.gmra.mrb[0].mxu0 %v235
        %v275 = vpop.f32.mrb[0].mxu0
        %v276 = vadd.f32 0.0, %v275
        %v277 = vpop.f32.mrb[0].mxu0
        %v278 = vpop.f32.mrb[0].mxu0
        %v279 = vpop.f32.mrb[0].mxu0
        %280 = vdwg.mxu0
        %v281 = vpack.c.bf16 %v276, %v276
        %vm282 = vcmask 254976
        %283 = vst.msk [vmem:[%s209] sm:$0x3] %vm282, %v281
        %s284 = sand.u32 %s98, 1
        %s285 = scalar_lea.sflag [#allocation5], %s284
        %s286 = sand.u32 %s98, 1
        %s287 = smul.addr %s286, 2
        %s288 = scalar_lea.vmem [#allocation8], %s287
        // Predicated region
        $region41: #{tpu_custom_call.1} parent=27 // pred_check
          %p289 = pneg %p108
        $region42: #{tpu_custom_call.1} parent=27 // pred_check_branch
          %291 = sbr.rel (%p289) target = $region44
        $region43: #{tpu_custom_call.1} parent=27 // pred_region
          %s293 = ssub.s32 32, 32
          %294 = vsyncadd %s285, %s293
          %s295 = sadd.s32 %s27, %s26
          %s296 = smul.addr %s295, 32
          %s297 = scalar_lea.hbm %s2, %s296
          %s299 = sshll.u32 %s288, 4
          %s300 = int_to_ptr.vmem [resolvable:$true] %s299
          %302 = dma.vmem_to_hbm [thread:$0]  %s300, 32, %s297, %s285
        $region44: #{tpu_custom_call.1} parent=27 // pred_fallthru
          _
      $region28: #{tpu_custom_call.1} parent=5 // pred_fallthru
        _
      %p303 = scmp.le.s32.totalorder 2, %s17
      // Predicated region
      $region45: #{tpu_custom_call.1} parent=5 // pred_check
        %p304 = pneg %p303
      $region46: #{tpu_custom_call.1} parent=5 // pred_check_branch
        %306 = sbr.rel (%p304) target = $region48
      $region47: #{tpu_custom_call.1} parent=5 // pred_region
        %s307 = ssub.s32 %s17, 2
        // Predicated region
        $region49: #{tpu_custom_call.1} parent=47 // pred_check
          %p308 = pneg %p114
        $region50: #{tpu_custom_call.1} parent=47 // pred_check_branch
          %310 = sbr.rel (%p308) target = $region52
        $region51: #{tpu_custom_call.1} parent=47 // pred_region
          %s311 = sand.u32 %s99, 1
          %s312 = scalar_lea.sflag [#allocation5], %s311
          %s313 = sand.u32 %s99, 1
          %s314 = smul.addr %s313, 2
          %s315 = scalar_lea.vmem [#allocation8], %s314
          %316 = dma.done %s312, 32
        $region52: #{tpu_custom_call.1} parent=47 // pred_fallthru
          _
      $region48: #{tpu_custom_call.1} parent=5 // pred_fallthru
        _
    $region6: #{tpu_custom_call.1} parent=1 // loop_footer
      %s21 = sadd.s32 1, %s17
    $region7: #{tpu_custom_call.1} parent=1 // loop_footer_branch
      %16 = sbr.rel target = $region3
    $region8: #{tpu_custom_call.1} parent=1 // loop_exit
      _
    %317 = vsyncpa [#allocation4], 1
    %s318 = scalar_lea.sflag [#allocation4], 1
    %319 = vsyncpa %s318, 1
    %320 = vsyncpa [#allocation7], 1
    %s321 = scalar_lea.sflag [#allocation7], 1
    %322 = vsyncpa %s321, 1
    %323 = vsyncpa [#allocation5], 1
    %s324 = scalar_lea.sflag [#allocation5], 1
    %325 = vsyncpa %s324, 1

</llo_original>
